<compile_context>
chip_gen: v5e
topology: v5e:2x2
jax: 0.10.0
libtpu: 0.0.40
codegen_flags: <defaults>
</compile_context>

<pallas_src>
import functools

import jax
import jax.numpy as jnp
from jax import lax
from jax.experimental import pallas as pl
from jax.experimental.pallas import tpu as pltpu

_EPS = 1e-8  # torch.nn.CosineSimilarity default eps


def _round_up(a, b):
    return (a + b - 1) // b * b


# --------------------------------------------------------------------------------------
# Fast path: pairwise cosine similarity matrix  S[i, j] = cos(X_i, Y_j) / temp
# --------------------------------------------------------------------------------------

def _pairwise_kernel_single_k(x_ref, y_ref, o_ref, *, inv_temp):
    # x_ref: (tm, H)   y_ref: (tn, H)   o_ref: (tm, tn).  Full feature dim in one step.
    xf = x_ref[...].astype(jnp.float32)
    yf = y_ref[...].astype(jnp.float32)
    dot = lax.dot_general(
        x_ref[...], y_ref[...], (((1,), (1,)), ((), ())),
        preferred_element_type=jnp.float32)                       # (tm, tn) on MXU
    nx = jnp.sum(xf * xf, axis=-1, keepdims=True)                 # (tm, 1)
    ny = jnp.sum(yf * yf, axis=-1, keepdims=True)                 # (tn, 1)
    # ||x||^2 * ||y||^2 outer product via a K=1 MXU matmul (avoids an XLU transpose).
    denom_sq = lax.dot_general(nx, ny, (((1,), (1,)), ((), ())),
                               preferred_element_type=jnp.float32)
    denom_sq = jnp.maximum(denom_sq, _EPS * _EPS)                 # torch: clamp on product
    o_ref[...] = (dot * lax.rsqrt(denom_sq) * inv_temp).astype(o_ref.dtype)


def _pairwise_kernel_multi_k(x_ref, y_ref, o_ref, acc_ref, nx_ref, ny_ref, *, inv_temp):
    # Grid axis 2 tiles the feature dim; dot + both squared norms are accumulated in
    # scratch (norms fused: X/Y tiles are only ever read once from HBM).
    k = pl.program_id(2)
    xf = x_ref[...].astype(jnp.float32)
    yf = y_ref[...].astype(jnp.float32)
    dot = lax.dot_general(
        x_ref[...], y_ref[...], (((1,), (1,)), ((), ())),
        preferred_element_type=jnp.float32)
    nx = jnp.sum(xf * xf, axis=-1, keepdims=True)                 # (tm, 1)
    ny = jnp.sum(yf * yf, axis=-1, keepdims=True)                 # (tn, 1)

    @pl.when(k == 0)
    def _():  # assign instead of zero-init + add
        acc_ref[...] = dot
        nx_ref[...] = nx
        ny_ref[...] = ny

    @pl.when(k > 0)
    def _():
        acc_ref[...] += dot
        nx_ref[...] += nx
        ny_ref[...] += ny

    @pl.when(k == pl.num_programs(2) - 1)
    def _():
        denom_sq = lax.dot_general(nx_ref[...], ny_ref[...], (((1,), (1,)), ((), ())),
                                   preferred_element_type=jnp.float32)
        denom_sq = jnp.maximum(denom_sq, _EPS * _EPS)
        o_ref[...] = (acc_ref[...] * lax.rsqrt(denom_sq) * inv_temp).astype(o_ref.dtype)


def _pairwise_cosine(x2d, y2d, temp, out_dtype):
    """x2d: (M, H), y2d: (N, H)  ->  (M, N) cosine-similarity / temp matrix."""
    M, H = x2d.shape
    N = y2d.shape[0]
    if x2d.dtype != out_dtype:
        x2d = x2d.astype(out_dtype)
    if y2d.dtype != out_dtype:
        y2d = y2d.astype(out_dtype)
    in_itemsize = jnp.dtype(out_dtype).itemsize
    out_itemsize = jnp.dtype(out_dtype).itemsize

    # ---- output tile sizes (lane-dense, larger tiles for big problems) ----
    if M >= 512 and N >= 512:
        tm = tn = 512
    else:
        tm = min(256, _round_up(M, 8))
        tn = min(256, _round_up(max(N, 128), 128))

    M_pad = _round_up(M, tm)
    N_pad = _round_up(N, tn)

    # v7x has 2 TensorCores: make sure the parallel grid has >= 2 blocks when the
    # problem allows it (one extra grid step at most on v5e/v6e, ~2x on v7x).
    if M_pad // tm == 1 and N_pad // tn == 1 and tm >= 16 and M > tm // 2:
        tm = _round_up(tm // 2, 8)
        M_pad = _round_up(M, tm)

    # ---- K tiling under an explicit (generation-safe) VMEM budget ----
    acc_out_bytes = tm * tn * (4 + 2 * out_itemsize) + 4 * (tm + tn)

    def working_set(tk_):
        # 2 inputs x 2 pipeline buffers + f32 accumulator + double-buffered output + norms.
        return 2 * 2 * (tm + tn) * tk_ * in_itemsize + acc_out_bytes

    VMEM_BUDGET = 48 << 20  # leaves headroom even on v7x (64 MiB physical VMEM)

    if working_set(H) <= VMEM_BUDGET:
        tk, H_pad, num_k = H, H, 1            # single K step, no accumulator needed
    else:
        cands = [t for t in (512, 256) if working_set(t) <= VMEM_BUDGET] or [256]
        tk = min(cands, key=lambda t: (_round_up(H, t), -t))   # minimize padding waste
        H_pad = _round_up(H, tk)
        num_k = H_pad // tk

    # Zero-pad (padded rows/cols give dot = norms = 0; denom clamps to eps^2; sliced off).
    if (M_pad, H_pad) != (M, H):
        x2d = jnp.pad(x2d, ((0, M_pad - M), (0, H_pad - H)))
    if (N_pad, H_pad) != (N, H):
        y2d = jnp.pad(y2d, ((0, N_pad - N), (0, H_pad - H)))

    vmem_limit = int(min(56 << 20, max(32 << 20, working_set(tk) + (8 << 20))))
    cost = pl.CostEstimate(
        flops=2 * M * N * H + 3 * (M + N) * H,
        transcendentals=M * N,
        bytes_accessed=(M * H + N * H) * in_itemsize + M * N * out_itemsize,
    )

    if num_k == 1:
        kernel = functools.partial(_pairwise_kernel_single_k, inv_temp=float(1.0 / temp))
        out = pl.pallas_call(
            kernel,
            out_shape=jax.ShapeDtypeStruct((M_pad, N_pad), out_dtype),
            grid_spec=pltpu.PrefetchScalarGridSpec(
                num_scalar_prefetch=0,
                grid=(M_pad // tm, N_pad // tn),
                in_specs=[
                    pl.BlockSpec((tm, tk), lambda i, j: (i, 0)),   # X rows
                    pl.BlockSpec((tn, tk), lambda i, j: (j, 0)),   # Y rows
                ],
                out_specs=pl.BlockSpec((tm, tn), lambda i, j: (i, j)),
            ),
            compiler_params=pltpu.CompilerParams(
                dimension_semantics=("parallel", "parallel"),
                vmem_limit_bytes=vmem_limit),
            cost_estimate=cost,
        )(x2d, y2d)
    else:
        kernel = functools.partial(_pairwise_kernel_multi_k, inv_temp=float(1.0 / temp))
        out = pl.pallas_call(
            kernel,
            out_shape=jax.ShapeDtypeStruct((M_pad, N_pad), out_dtype),
            grid_spec=pltpu.PrefetchScalarGridSpec(
                num_scalar_prefetch=0,
                grid=(M_pad // tm, N_pad // tn, num_k),
                in_specs=[
                    pl.BlockSpec((tm, tk), lambda i, j, k: (i, k)),   # X rows
                    pl.BlockSpec((tn, tk), lambda i, j, k: (j, k)),   # Y rows
                ],
                out_specs=pl.BlockSpec((tm, tn), lambda i, j, k: (i, j)),
                scratch_shapes=[pltpu.VMEM((tm, tn), jnp.float32),    # dot accumulator
                                pltpu.VMEM((tm, 1), jnp.float32),     # sum x^2
                                pltpu.VMEM((tn, 1), jnp.float32)],    # sum y^2
            ),
            compiler_params=pltpu.CompilerParams(
                dimension_semantics=("parallel", "parallel", "arbitrary"),
                vmem_limit_bytes=vmem_limit),
            cost_estimate=cost,
        )(x2d, y2d)

    return out[:M, :N]


# --------------------------------------------------------------------------------------
# General fallback: elementwise cosine similarity over matching rows
# --------------------------------------------------------------------------------------

def _elementwise_kernel(x_ref, y_ref, o_ref, *, inv_temp):
    # x_ref, y_ref: (row_tile, H); o_ref: (row_tile, 1)
    x = x_ref[...].astype(jnp.float32)
    y = y_ref[...].astype(jnp.float32)
    dot = jnp.sum(x * y, axis=-1, keepdims=True)
    nx = jnp.sum(x * x, axis=-1, keepdims=True)
    ny = jnp.sum(y * y, axis=-1, keepdims=True)
    inv = lax.rsqrt(jnp.maximum(nx * ny, _EPS * _EPS))
    o_ref[...] = (dot * inv * inv_temp).astype(o_ref.dtype)


def _elementwise_cosine(xb, yb, temp, out_dtype):
    """xb, yb: (n, H) row-matched operands -> (n,) cosine similarity / temp."""
    n, h = xb.shape
    itemsize = max(jnp.dtype(xb.dtype).itemsize, jnp.dtype(yb.dtype).itemsize)
    # Keep the double-buffered input tiles (2 inputs x 2 buffers) within ~24 MiB and
    # amortize the ~0.35 us per-grid-step overhead with large row tiles.
    budget = 24 << 20
    max_rows = max(8, (budget // max(4 * h * itemsize, 1)) // 8 * 8)
    row_tile = max(8, min(2048, _round_up(n, 8), max_rows))
    n_pad = _round_up(n, row_tile)
    if n_pad != n:
        pad = ((0, n_pad - n), (0, 0))
        xb = jnp.pad(xb, pad)
        yb = jnp.pad(yb, pad)

    kernel = functools.partial(_elementwise_kernel, inv_temp=float(1.0 / temp))
    vmem_limit = int(min(56 << 20, max(32 << 20, 4 * row_tile * h * itemsize + (4 << 20))))

    # NOTE: output is (n, 1) (lane-sparse) but output bytes are 1/H of the input bytes,
    # so the store pattern is not the bottleneck on this HBM-bound path.
    out = pl.pallas_call(
        kernel,
        out_shape=jax.ShapeDtypeStruct((n_pad, 1), out_dtype),
        grid_spec=pltpu.PrefetchScalarGridSpec(
            num_scalar_prefetch=0,
            grid=(n_pad // row_tile,),
            in_specs=[
                pl.BlockSpec((row_tile, h), lambda i: (i, 0)),
                pl.BlockSpec((row_tile, h), lambda i: (i, 0)),
            ],
            out_specs=pl.BlockSpec((row_tile, 1), lambda i: (i, 0)),
        ),
        compiler_params=pltpu.CompilerParams(
            dimension_semantics=("parallel",),
            vmem_limit_bytes=vmem_limit),
    )(xb, yb)

    return out[:n, 0]


# --------------------------------------------------------------------------------------
# Public wrapper = Similarity.forward
# --------------------------------------------------------------------------------------

def similarity(x, y, temp=0.07):
    """Pallas equivalent of Similarity(temp).forward(x, y)."""
    x = jnp.asarray(x)
    y = jnp.asarray(y)
    h = x.shape[-1]
    assert y.shape[-1] == h, "last (feature) dims must match"
    lead_shape = jnp.broadcast_shapes(x.shape[:-1], y.shape[:-1])
    out_dtype = jnp.promote_types(x.dtype, y.dtype)

    # Fast pairwise path (SimCSE pattern): all M*N dot products via one MXU matmul.
    if x.ndim == 3 and y.ndim == 3:
        if x.shape[1] == 1 and y.shape[0] == 1:
            # x (M,1,H), y (1,N,H) -> out[i,j] = cos(x_i, y_j)
            return _pairwise_cosine(x.reshape(x.shape[0], h),
                                    y.reshape(y.shape[1], h), temp, out_dtype)
        if x.shape[0] == 1 and y.shape[1] == 1:
            # x (1,N,H), y (M,1,H) -> out[i,j] = cos(y_i, x_j)  (cosine is symmetric)
            return _pairwise_cosine(y.reshape(y.shape[0], h),
                                    x.reshape(x.shape[1], h), temp, out_dtype)

    # General fallback (row-matched elementwise reduction).
    if x.shape == y.shape:
        # No broadcast needed: pass operands straight through (reshape is free).
        xb = x.reshape(-1, h)
        yb = y.reshape(-1, h)
    else:
        # TODO(synk): express other broadcast patterns through BlockSpec index_maps
        # instead of materializing broadcast copies in HBM.
        xb = jnp.broadcast_to(x, lead_shape + (h,)).reshape(-1, h)
        yb = jnp.broadcast_to(y, lead_shape + (h,)).reshape(-1, h)
    out = _elementwise_cosine(xb, yb, temp, out_dtype)
    return out.reshape(lead_shape)


if __name__ == "__main__":
    key = jax.random.PRNGKey(0)
    kx, ky = jax.random.split(key)

    B, H = 8, 32
    temp = 0.07

    # Canonical SimCSE usage: x (B, 1, H), y (1, B, H) -> sims (B, B)   [pairwise MXU path]
    x = jax.random.normal(kx, (B, 1, H), dtype=jnp.float32)
    y = jax.random.normal(ky, (1, B, H), dtype=jnp.float32)

    sims = jax.block_until_ready(similarity(x, y, temp=temp))

    xb = jnp.broadcast_to(x, (B, B, H))
    yb = jnp.broadcast_to(y, (B, B, H))
    ref = (jnp.sum(xb * yb, axis=-1)
           / jnp.maximum(jnp.linalg.norm(xb, axis=-1) * jnp.linalg.norm(yb, axis=-1), _EPS)
           / temp)
    assert sims.shape == (B, B)
    assert jnp.allclose(sims, ref, atol=1e-4, rtol=1e-4)

    # Same-shape inputs exercise the elementwise fallback (no broadcast materialization).
    x2 = jax.random.normal(kx, (2, B, H), dtype=jnp.float32)
    y2 = jax.random.normal(ky, (2, B, H), dtype=jnp.float32)
    sims2 = jax.block_until_ready(similarity(x2, y2, temp=temp))
    ref2 = (jnp.sum(x2 * y2, axis=-1)
            / jnp.maximum(jnp.linalg.norm(x2, axis=-1) * jnp.linalg.norm(y2, axis=-1), _EPS)
            / temp)
    assert sims2.shape == (2, B)
    assert jnp.allclose(sims2, ref2, atol=1e-4, rtol=1e-4)

    print("KERNEL_OK")
</pallas_src>

<mosaic_0001>
module attributes {stable_mosaic.version = 11 : i64} {
  func.func @_pairwise_kernel_single_k(%arg0: i32, %arg1: i32, %arg2: memref<8x32xf32, #tpu.memory_space<vmem>>, %arg3: memref<128x32xf32, #tpu.memory_space<vmem>>, %arg4: memref<8x128xf32, #tpu.memory_space<vmem>>) attributes {dimension_semantics = [#tpu.dimension_semantics<parallel>, #tpu.dimension_semantics<parallel>], iteration_bounds = array<i64: 1, 1>, scalar_prefetch = 0 : i64, scratch_operands = 0 : i64, tpu.core_type = #tpu.core_type<tc>, window_params = [{transform_indices = @transform_0, window_bounds = array<i64: 8, 32>}, {transform_indices = @transform_1, window_bounds = array<i64: 128, 32>}, {transform_indices = @transform_2, window_bounds = array<i64: 8, 128>}]} {
    %c0 = arith.constant 0 : index
    %c0_0 = arith.constant 0 : index
    %0 = vector.load %arg2[%c0, %c0_0] : memref<8x32xf32, #tpu.memory_space<vmem>>, vector<8x32xf32>
    %c0_1 = arith.constant 0 : index
    %c0_2 = arith.constant 0 : index
    %1 = vector.load %arg3[%c0_1, %c0_2] : memref<128x32xf32, #tpu.memory_space<vmem>>, vector<128x32xf32>
    %c0_3 = arith.constant 0 : index
    %c0_4 = arith.constant 0 : index
    %2 = vector.load %arg2[%c0_3, %c0_4] : memref<8x32xf32, #tpu.memory_space<vmem>>, vector<8x32xf32>
    %c0_5 = arith.constant 0 : index
    %c0_6 = arith.constant 0 : index
    %3 = vector.load %arg3[%c0_5, %c0_6] : memref<128x32xf32, #tpu.memory_space<vmem>>, vector<128x32xf32>
    %cst = arith.constant dense<0.000000e+00> : vector<8x128xf32>
    %4 = tpu.matmul %2, %3, %cst {dimension_numbers = #tpu.dot_dimension_numbers<[1], [1], [0], [0], [0, 0, 1, 0], [], []>} : vector<8x32xf32>, vector<128x32xf32>, vector<8x128xf32> -> vector<8x128xf32>
    %5 = arith.mulf %0, %0 : vector<8x32xf32>
    %cst_7 = arith.constant dense<0.000000e+00> : vector<8xf32>
    %6 = vector.multi_reduction <add>, %5, %cst_7 [1] : vector<8x32xf32> to vector<8xf32>
    %7 = vector.shape_cast %6 : vector<8xf32> to vector<8x1xf32>
    %8 = arith.mulf %1, %1 : vector<128x32xf32>
    %cst_8 = arith.constant dense<0.000000e+00> : vector<128xf32>
    %9 = vector.multi_reduction <add>, %8, %cst_8 [1] : vector<128x32xf32> to vector<128xf32>
    %10 = vector.shape_cast %9 : vector<128xf32> to vector<128x1xf32>
    %cst_9 = arith.constant dense<0.000000e+00> : vector<8x128xf32>
    %11 = tpu.matmul %7, %10, %cst_9 {dimension_numbers = #tpu.dot_dimension_numbers<[1], [1], [0], [0], [0, 0, 1, 0], [], []>} : vector<8x1xf32>, vector<128x1xf32>, vector<8x128xf32> -> vector<8x128xf32>
    %cst_10 = arith.constant 1.000000e-16 : f32
    %12 = vector.broadcast %cst_10 : f32 to vector<8x128xf32>
    %13 = arith.maximumf %11, %12 : vector<8x128xf32>
    %14 = math.rsqrt %13 : vector<8x128xf32>
    %15 = arith.mulf %4, %14 : vector<8x128xf32>
    %cst_11 = arith.constant 14.2857141 : f32
    %16 = vector.broadcast %cst_11 : f32 to vector<8x128xf32>
    %17 = arith.mulf %15, %16 : vector<8x128xf32>
    %c0_12 = arith.constant 0 : index
    %c0_13 = arith.constant 0 : index
    %18 = vector.load %arg4[%c0_12, %c0_13] : memref<8x128xf32, #tpu.memory_space<vmem>>, vector<8x128xf32>
    tpu.vector_store %arg4[%c0_12, %c0_13], %17 {strides = array<i32>} : memref<8x128xf32, #tpu.memory_space<vmem>>, vector<8x128xf32>,
    return
  }
  func.func @transform_0(%arg0: i32, %arg1: i32) -> (i32, i32) {
    %c0_i32 = arith.constant 0 : i32
    %c0_i32_0 = arith.constant 0 : i32
    return %arg0, %c0_i32 : i32, i32
  }
  func.func @transform_1(%arg0: i32, %arg1: i32) -> (i32, i32) {
    %c0_i32 = arith.constant 0 : i32
    %c0_i32_0 = arith.constant 0 : i32
    return %arg1, %c0_i32 : i32, i32
  }
  func.func @transform_2(%arg0: i32, %arg1: i32) -> (i32, i32) {
    %c0_i32 = arith.constant 0 : i32
    return %arg0, %arg1 : i32, i32
  }
}

</mosaic_0001>

<llo_original>
// kernel: tpu_custom_call.1
$region0: #{tpu_custom_call.1}
  #allocation0 [shape = 'u32[]', space=smem, size = 0x4, offset = 0x4, fixed_abs, tag = 'smem constant byte address 0x4 - core index']
  #allocation1 [shape = 'u32[72,128]{1,0:T(1,128)}', space=vmem, size = 0x9000, scoped, tag = 'internal scratch']
  %s0 = inlined_call_operand.vmem [shape: f32[8,32], index: 0, kind: input, shape index: {}]
  %s1 = inlined_call_operand.vmem [shape: f32[128,32], index: 1, kind: input, shape index: {}]
  %s2 = inlined_call_operand.hbm [shape: f32[8,128], index: 2, kind: output, shape index: {}]
  %s3 = sld [smem:[#allocation0]]
  $region18: #{tpu_custom_call.1} parent=0
    _
  %s5 = ssub.s32 1, %s3
  %s6 = scalar_select 0, %s5, %s3
  $region1: #{tpu_custom_call.1} parent=0
    #allocation2 [shape = 'u8[4096]{0}', space=vmem, size = 0x1000, scoped, tag = 'output window, operand 0, single buffered']
    #allocation3 [shape = 's32[1]{0}', space=sflag, size = 0x4, scoped, tag = 'scoped memory for tpu_custom_call.1']
    %7 = vsyncpa [#allocation3], 0
    // Predicated region
    $region2: #{tpu_custom_call.1} parent=1 // pred_check
      _
    $region3: #{tpu_custom_call.1} parent=1 // pred_check_branch
      %9 = sbr.rel (0) target = $region5
    $region4: #{tpu_custom_call.1} parent=1 // pred_region
      _
    $region5: #{tpu_custom_call.1} parent=1 // pred_fallthru
      _
    // Predicated region
    $region6: #{tpu_custom_call.1} parent=1 // pred_check
      _
    $region7: #{tpu_custom_call.1} parent=1 // pred_check_branch
      %11 = sbr.rel (0) target = $region9
    $region8: #{tpu_custom_call.1} parent=1 // pred_region
      _
    $region9: #{tpu_custom_call.1} parent=1 // pred_fallthru
      _
    %v12 = vld [vmem:[%s0] sm:$0xff]
    %v13 = vld [vmem:[%s1] sm:$0xff]
    %v14 = vld [vmem:[%s1 + $0x8] sm:$0xff]
    %v15 = vld [vmem:[%s1 + $0x10] sm:$0xff]
    %v16 = vld [vmem:[%s1 + $0x18] sm:$0xff]
    %v17 = vld [vmem:[%s1 + $0x20] sm:$0xff]
    %v18 = vld [vmem:[%s1 + $0x28] sm:$0xff]
    %v19 = vld [vmem:[%s1 + $0x30] sm:$0xff]
    %v20 = vld [vmem:[%s1 + $0x38] sm:$0xff]
    %v21 = vld [vmem:[%s1 + $0x40] sm:$0xff]
    %v22 = vld [vmem:[%s1 + $0x48] sm:$0xff]
    %v23 = vld [vmem:[%s1 + $0x50] sm:$0xff]
    %v24 = vld [vmem:[%s1 + $0x58] sm:$0xff]
    %v25 = vld [vmem:[%s1 + $0x60] sm:$0xff]
    %v26 = vld [vmem:[%s1 + $0x68] sm:$0xff]
    %v27 = vld [vmem:[%s1 + $0x70] sm:$0xff]
    %v28 = vld [vmem:[%s1 + $0x78] sm:$0xff]
    %vm29 = vcmask 261120
    %v31 = vsel %vm29, %v12, 0
    %v34 = vsel %vm29, %v13, 0
    %v37 = vsel %vm29, %v14, 0
    %v40 = vsel %vm29, %v15, 0
    %v43 = vsel %vm29, %v16, 0
    %v46 = vsel %vm29, %v17, 0
    %v49 = vsel %vm29, %v18, 0
    %v52 = vsel %vm29, %v19, 0
    %v55 = vsel %vm29, %v20, 0
    %v58 = vsel %vm29, %v21, 0
    %v61 = vsel %vm29, %v22, 0
    %v64 = vsel %vm29, %v23, 0
    %v67 = vsel %vm29, %v24, 0
    %v70 = vsel %vm29, %v25, 0
    %v73 = vsel %vm29, %v26, 0
    %v76 = vsel %vm29, %v27, 0
    %v79 = vsel %vm29, %v28, 0
    %81 = vmatpush.xpose.msra.mxu0 %v79
    %82 = vmatpush.xpose.msra.mxu0 %v76
    %83 = vmatpush.xpose.msra.mxu0 %v73
    %84 = vmatpush.xpose.msra.mxu0 %v70
    %85 = vmatpush.xpose.msra.mxu0 %v67
    %86 = vmatpush.xpose.msra.mxu0 %v64
    %87 = vmatpush.xpose.msra.mxu0 %v61
    %88 = vmatpush.xpose.msra.mxu0 %v58
    %89 = vmatpush.xpose.msra.mxu0 %v55
    %90 = vmatpush.xpose.msra.mxu0 %v52
    %91 = vmatpush.xpose.msra.mxu0 %v49
    %92 = vmatpush.xpose.msra.mxu0 %v46
    %93 = vmatpush.xpose.msra.mxu0 %v43
    %94 = vmatpush.xpose.msra.mxu0 %v40
    %95 = vmatpush.xpose.msra.mxu0 %v37
    %96 = vmatpush.xpose.msra.mxu0 %v34
    %97 = vmatmul.f32.gmra.mxu0 %v31
    %v98 = vpop.f32.mrf.mxu0
    %v99 = vadd.f32 0.0, %v98
    %100 = vdwg.mxu0
    %v101 = vmul.f32 %v12, %v12
    %v102 = vsel %vm29, %v101, 0.0
    %103 = vadd.xlane.f32.xlu0 %v102
    %v104 = vpop.xlane.xlu0 %103
    %v105 = vmul.f32 %v13, %v13
    %v106 = vmul.f32 %v14, %v14
    %v107 = vmul.f32 %v15, %v15
    %v108 = vmul.f32 %v16, %v16
    %v109 = vmul.f32 %v17, %v17
    %v110 = vmul.f32 %v18, %v18
    %v111 = vmul.f32 %v19, %v19
    %v112 = vmul.f32 %v20, %v20
    %v113 = vmul.f32 %v21, %v21
    %v114 = vmul.f32 %v22, %v22
    %v115 = vmul.f32 %v23, %v23
    %v116 = vmul.f32 %v24, %v24
    %v117 = vmul.f32 %v25, %v25
    %v118 = vmul.f32 %v26, %v26
    %v119 = vmul.f32 %v27, %v27
    %v120 = vmul.f32 %v28, %v28
    %v121 = vsel %vm29, %v105, 0.0
    %122 = vadd.xlane.f32.xlu0 %v121
    %v123 = vpop.xlane.xlu0 %122
    %v124 = vsel %vm29, %v106, 0.0
    %125 = vadd.xlane.f32.xlu0 %v124
    %v126 = vpop.xlane.xlu0 %125
    %v127 = vsel %vm29, %v107, 0.0
    %128 = vadd.xlane.f32.xlu0 %v127
    %v129 = vpop.xlane.xlu0 %128
    %v130 = vsel %vm29, %v108, 0.0
    %131 = vadd.xlane.f32.xlu0 %v130
    %v132 = vpop.xlane.xlu0 %131
    %v133 = vsel %vm29, %v109, 0.0
    %134 = vadd.xlane.f32.xlu0 %v133
    %v135 = vpop.xlane.xlu0 %134
    %v136 = vsel %vm29, %v110, 0.0
    %137 = vadd.xlane.f32.xlu0 %v136
    %v138 = vpop.xlane.xlu0 %137
    %v139 = vsel %vm29, %v111, 0.0
    %140 = vadd.xlane.f32.xlu0 %v139
    %v141 = vpop.xlane.xlu0 %140
    %v142 = vsel %vm29, %v112, 0.0
    %143 = vadd.xlane.f32.xlu0 %v142
    %v144 = vpop.xlane.xlu0 %143
    %v145 = vsel %vm29, %v113, 0.0
    %146 = vadd.xlane.f32.xlu0 %v145
    %v147 = vpop.xlane.xlu0 %146
    %v148 = vsel %vm29, %v114, 0.0
    %149 = vadd.xlane.f32.xlu0 %v148
    %v150 = vpop.xlane.xlu0 %149
    %v151 = vsel %vm29, %v115, 0.0
    %152 = vadd.xlane.f32.xlu0 %v151
    %v153 = vpop.xlane.xlu0 %152
    %v154 = vsel %vm29, %v116, 0.0
    %155 = vadd.xlane.f32.xlu0 %v154
    %v156 = vpop.xlane.xlu0 %155
    %v157 = vsel %vm29, %v117, 0.0
    %158 = vadd.xlane.f32.xlu0 %v157
    %v159 = vpop.xlane.xlu0 %158
    %v160 = vsel %vm29, %v118, 0.0
    %161 = vadd.xlane.f32.xlu0 %v160
    %v162 = vpop.xlane.xlu0 %161
    %v163 = vsel %vm29, %v119, 0.0
    %164 = vadd.xlane.f32.xlu0 %v163
    %v165 = vpop.xlane.xlu0 %164
    %v166 = vsel %vm29, %v120, 0.0
    %167 = vadd.xlane.f32.xlu0 %v166
    %v168 = vpop.xlane.xlu0 %167
    %vm169 = vcmask 7168
    %v171 = vsel %vm169, %v104, 0
    %v174 = vsel %vm169, %v123, 0
    %v177 = vsel %vm169, %v126, 0
    %v180 = vsel %vm169, %v129, 0
    %v183 = vsel %vm169, %v132, 0
    %v186 = vsel %vm169, %v135, 0
    %v189 = vsel %vm169, %v138, 0
    %v192 = vsel %vm169, %v141, 0
    %v195 = vsel %vm169, %v144, 0
    %v198 = vsel %vm169, %v147, 0
    %v201 = vsel %vm169, %v150, 0
    %v204 = vsel %vm169, %v153, 0
    %v207 = vsel %vm169, %v156, 0
    %v210 = vsel %vm169, %v159, 0
    %v213 = vsel %vm169, %v162, 0
    %v216 = vsel %vm169, %v165, 0
    %v219 = vsel %vm169, %v168, 0
    %221 = vmatpush.xpose.msra.mxu0 %v219
    %222 = vmatpush.xpose.msra.mxu0 %v216
    %223 = vmatpush.xpose.msra.mxu0 %v213
    %224 = vmatpush.xpose.msra.mxu0 %v210
    %225 = vmatpush.xpose.msra.mxu0 %v207
    %226 = vmatpush.xpose.msra.mxu0 %v204
    %227 = vmatpush.xpose.msra.mxu0 %v201
    %228 = vmatpush.xpose.msra.mxu0 %v198
    %229 = vmatpush.xpose.msra.mxu0 %v195
    %230 = vmatpush.xpose.msra.mxu0 %v192
    %231 = vmatpush.xpose.msra.mxu0 %v189
    %232 = vmatpush.xpose.msra.mxu0 %v186
    %233 = vmatpush.xpose.msra.mxu0 %v183
    %234 = vmatpush.xpose.msra.mxu0 %v180
    %235 = vmatpush.xpose.msra.mxu0 %v177
    %236 = vmatpush.xpose.msra.mxu0 %v174
    %237 = vmatmul.f32.gmra.mxu0 %v171
    %v238 = vpop.f32.mrf.mxu0
    %v239 = vadd.f32 0.0, %v238
    %240 = vdwg.mxu0
    %v241 = vmax.f32 %v239, 1e-16
    %v242 = vrsqrt.pop %v241
    %v243 = vmul.f32 %v242, %v241
    %v244 = vmul.f32 %v243, %v242
    %v245 = vmul.f32 0.5, %v244
    %v246 = vsub.f32 1.5, %v245
    %v247 = vmul.f32 %v242, %v246
    %vm248 = vweird.f32 %v241
    %vm249 = vweird.f32 %v242
    %vm250 = vmor %vm248, %vm249
    %v251 = vsel %vm250, %v242, %v247
    %v252 = vmul.f32 %v99, %v251
    %v253 = vmul.f32 %v252, 14.285714
    %254 = vst [vmem:[#allocation2] sm:$0xff] %v253
    // Predicated region
    $region10: #{tpu_custom_call.1} parent=1 // pred_check
      _
    $region11: #{tpu_custom_call.1} parent=1 // pred_check_branch
      %256 = sbr.rel (0) target = $region13
    $region12: #{tpu_custom_call.1} parent=1 // pred_region
      %258 = vsyncadd [#allocation3], 0
      %s260 = sshll.u32 [#allocation2], 4
      %s261 = int_to_ptr.vmem [resolvable:$true] %s260
      %s262 = sshll.u32 %s2, 4
      %s263 = int_to_ptr.hbm [resolvable:$true] %s262
      %265 = dma.vmem_to_hbm [thread:$0]  %s261, 128, %s263, [#allocation3]
    $region13: #{tpu_custom_call.1} parent=1 // pred_fallthru
      _
    // Predicated region
    $region14: #{tpu_custom_call.1} parent=1 // pred_check
      _
    $region15: #{tpu_custom_call.1} parent=1 // pred_check_branch
      %267 = sbr.rel (0) target = $region17
    $region16: #{tpu_custom_call.1} parent=1 // pred_region
      %269 = dma.done [#allocation3], 128
    $region17: #{tpu_custom_call.1} parent=1 // pred_fallthru
      _
    %270 = vsyncpa [#allocation3], 1

</llo_original>
